<compile_context>
chip_gen: v7x
topology: tpu7x:2x2x1
jax: 0.10.0
libtpu: 0.0.40
codegen_flags: <defaults>
</compile_context>

<pallas_src>
import math
from functools import lru_cache, partial

import jax
import jax.numpy as jnp
import numpy as np
from jax.experimental import pallas as pl
from jax.experimental.pallas import tpu as pltpu

PRECOMPUTE_MAX_POS = 4096


# --------------------------------------------------------------------------
# Device-aware VMEM budget (v5e/v6e: 128 MiB, v7x: 64 MiB per TensorCore)
# --------------------------------------------------------------------------
@lru_cache(maxsize=None)
def _vmem_limit_bytes():
    cap = None
    try:
        info = pltpu.get_tpu_info()
        cap = getattr(info, "vmem_capacity_bytes", None)
    except Exception:
        cap = None
    if not cap:
        cap = 64 * 1024 * 1024          # conservative (v7x-sized) fallback
    return int(min(cap * 5 // 8, 100 * 1024 * 1024))


# --------------------------------------------------------------------------
# Glue: sinusoidal position table (matches precompute_freqs_cis)
# --------------------------------------------------------------------------
def precompute_freqs_cis(dim, end, theta=10000.0):
    freqs = 1.0 / (theta ** (jnp.arange(0, dim, 2)[: dim // 2].astype(jnp.float32) / dim))
    t = jnp.arange(end, dtype=jnp.float32)
    f = jnp.outer(t, freqs)
    return jnp.concatenate([jnp.cos(f), jnp.sin(f)], axis=-1)  # (end, dim)


# --------------------------------------------------------------------------
# Fused ConvNeXtV2 block kernel (one grid step per batch element)
#   x_ref  : (1, n_halo, D) bf16  zero-halo padded sequence (pad rows front/back)
#   pd_ref : (16, D) f32          rows 0..6 conv taps, 7 conv bias, 8 LN w,
#                                 9 LN b, 10 pwconv2 bias
#   ph_ref : (8, H) f32           row 0 pwconv1 bias, 1 GRN gamma, 2 GRN beta
#   w1_ref : (D, H) bf16          pwconv1 weight
#   w2_ref : (H, D) bf16          pwconv2 weight
#   o_ref  : (1, n_halo, D) bf16  output (aliased with x)
# --------------------------------------------------------------------------
def _convnext_block_kernel(x_ref, pd_ref, ph_ref, w1_ref, w2_ref, o_ref,
                           *, n_pad, n_real, pad):
    n_halo = x_ref.shape[1]
    D = x_ref.shape[2]

    # ---- depthwise Conv1d (kernel 7, padding 3, groups=D), channels-last ----
    # Zero padding lives in the halo rows; each tap is an XLU roll of the f32
    # window, sliced to the n_pad kept rows before the FMA (no wasted halo FMAs).
    xw = x_ref[0].astype(jnp.float32)                         # (n_halo, D)
    acc = jnp.zeros((n_pad, D), jnp.float32)
    for k in range(7):
        # tap[r] = xw[r + pad + k - 3]   (conv output row r reads input row r+k-3)
        tap = pltpu.roll(xw, shift=n_halo - (pad + k - 3), axis=0)[:n_pad, :]
        acc = acc + tap * pd_ref[k:k + 1, :]
    acc = acc + pd_ref[7:8, :]                                # + conv bias

    # ---- LayerNorm over channels (f32 statistics, eps = 1e-6) ----
    mean = jnp.mean(acc, axis=-1, keepdims=True)
    var = jnp.mean(jnp.square(acc - mean), axis=-1, keepdims=True)
    xn = (acc - mean) * jax.lax.rsqrt(var + 1e-6)
    xn = xn * pd_ref[8:9, :] + pd_ref[9:10, :]

    # ---- pwconv1 on the MXU (bf16 operands, f32 accum) + exact (erf) GELU ----
    h = jnp.dot(xn.astype(jnp.bfloat16), w1_ref[...],
                preferred_element_type=jnp.float32) + ph_ref[0:1, :]
    h = 0.5 * h * (1.0 + jax.lax.erf(h * (1.0 / math.sqrt(2.0))))

    # ---- GRN over the real sequence rows (f32), normalisation hoisted ----
    if n_real < n_pad:
        rows = jax.lax.broadcasted_iota(jnp.int32, (n_pad, 1), 0)
        hm = jnp.where(rows < n_real, h, 0.0)
    else:
        rows = None
        hm = h
    ssq = jnp.sum(hm * hm, axis=0, keepdims=True)             # (1, H)
    gx = jnp.sqrt(ssq)
    nx = gx / (jnp.mean(gx, axis=-1, keepdims=True) + 1e-6)   # (1, H)
    scale = ph_ref[1:2, :] * nx + 1.0                         # gamma*nx + 1
    g = h * scale + ph_ref[2:3, :]                            # == gamma*(h*nx)+beta+h

    # ---- pwconv2 on the MXU (bf16, f32 accum) + bias + residual ----
    y = jnp.dot(g.astype(jnp.bfloat16), w2_ref[...],
                preferred_element_type=jnp.float32) + pd_ref[10:11, :]
    res = x_ref[0, pad:pad + n_pad, :].astype(jnp.float32)
    out = res + y

    # Keep padded tail rows exactly zero so the next block's conv halo is valid.
    if n_real < n_pad:
        out = jnp.where(rows < n_real, out, 0.0)

    o_ref[0, pad:pad + n_pad, :] = out.astype(o_ref.dtype)
    # Halo rows are rewritten as zeros (output aliases the input, but explicit
    # writes keep the kernel correct even without the alias).
    o_ref[0, :pad, :] = jnp.zeros((pad, D), o_ref.dtype)
    o_ref[0, pad + n_pad:, :] = jnp.zeros((n_halo - pad - n_pad, D), o_ref.dtype)


# --------------------------------------------------------------------------
# One ConvNeXtV2 block = one pallas_call over grid=(B,)
# --------------------------------------------------------------------------
def convnext_block(x_halo, blk, *, n_real, n_pad, pad, vmem_limit):
    B, n_halo, D = x_halo.shape
    H = blk["w1"].shape[1]
    return pl.pallas_call(
        partial(_convnext_block_kernel, n_pad=n_pad, n_real=n_real, pad=pad),
        grid=(B,),
        in_specs=[
            pl.BlockSpec((1, n_halo, D), lambda b: (b, 0, 0)),  # halo sequence (bf16)
            pl.BlockSpec((16, D), lambda b: (0, 0)),            # packed D-sized params
            pl.BlockSpec((8, H), lambda b: (0, 0)),             # packed H-sized params
            pl.BlockSpec((D, H), lambda b: (0, 0)),             # w1 (bf16)
            pl.BlockSpec((H, D), lambda b: (0, 0)),             # w2 (bf16)
        ],
        out_specs=pl.BlockSpec((1, n_halo, D), lambda b: (b, 0, 0)),
        out_shape=jax.ShapeDtypeStruct((B, n_halo, D), jnp.bfloat16),
        input_output_aliases={0: 0},                            # in-place write-back
        compiler_params=pltpu.CompilerParams(
            dimension_semantics=("parallel",),
            vmem_limit_bytes=vmem_limit),
    )(x_halo, blk["pd"], blk["ph"], blk["w1"], blk["w2"])


# --------------------------------------------------------------------------
# Parameter init (deterministic, matches module shapes)
# --------------------------------------------------------------------------
def init_params(key, text_num_embeds, text_dim, conv_layers, conv_mult):
    D, H = text_dim, text_dim * conv_mult
    keys = jax.random.split(key, 1 + conv_layers)
    params = {
        "embed": jax.random.normal(keys[0], (text_num_embeds + 1, D), jnp.float32) * 0.02,
        "blocks": [],
    }
    for i in range(conv_layers):
        k = jax.random.split(keys[1 + i], 8)
        # Packed D-sized params: rows 0..6 depthwise conv taps, 7 conv bias,
        # 8 LayerNorm weight, 9 LayerNorm bias, 10 pwconv2 bias, 11..15 zero pad.
        pd = jnp.zeros((16, D), jnp.float32)
        pd = pd.at[0:7].set(jax.random.normal(k[0], (7, D), jnp.float32) * 0.1)
        pd = pd.at[7].set(jax.random.normal(k[1], (D,), jnp.float32) * 0.01)
        pd = pd.at[8].set(jnp.ones((D,), jnp.float32))
        pd = pd.at[10].set(jax.random.normal(k[2], (D,), jnp.float32) * 0.01)
        # Packed H-sized params: row 0 pwconv1 bias, 1 GRN gamma, 2 GRN beta.
        # (the module inits gamma/beta to zero; small random values exercise the path)
        ph = jnp.zeros((8, H), jnp.float32)
        ph = ph.at[0].set(jax.random.normal(k[3], (H,), jnp.float32) * 0.01)
        ph = ph.at[1].set(jax.random.normal(k[4], (H,), jnp.float32) * 0.1)
        ph = ph.at[2].set(jax.random.normal(k[5], (H,), jnp.float32) * 0.1)
        params["blocks"].append({
            "pd": pd,
            "ph": ph,
            "w1": (jax.random.normal(k[6], (D, H), jnp.float32) / math.sqrt(D)).astype(jnp.bfloat16),
            "w2": (jax.random.normal(k[7], (H, D), jnp.float32) / math.sqrt(H)).astype(jnp.bfloat16),
        })
    return params


# --------------------------------------------------------------------------
# Full forward (TextEmbedding.forward)
# --------------------------------------------------------------------------
@partial(jax.jit, static_argnames=("seq_len",))
def text_embedding_forward(params, freqs_cis, text_ids, *, seq_len):
    B, nt_len = text_ids.shape
    D = params["embed"].shape[1]
    assert nt_len == seq_len, "text must already be padded/truncated to seq_len"

    # Embedding gather + position-table add: plain JAX, fused by XLA.
    x = jnp.take(params["embed"], text_ids, axis=0)                          # (B, N, D)
    pos_idx = jnp.minimum(jnp.arange(seq_len), PRECOMPUTE_MAX_POS - 1)
    x = x + jnp.take(freqs_cis, pos_idx, axis=0)[None]

    if not params["blocks"]:
        return x

    # Zero-halo layout: 16 zero rows front/back (bf16 sublane-tile aligned) so
    # the k=7 depthwise conv's zero padding is free; residual stream is bf16.
    pad = 16
    n_pad = ((seq_len + 15) // 16) * 16
    n_halo = n_pad + 2 * pad
    x_halo = jnp.zeros((B, n_halo, D), jnp.bfloat16)
    x_halo = jax.lax.dynamic_update_slice(x_halo, x.astype(jnp.bfloat16), (0, pad, 0))

    vmem_limit = _vmem_limit_bytes()
    for blk in params["blocks"]:
        x_halo = convnext_block(x_halo, blk, n_real=seq_len, n_pad=n_pad,
                                pad=pad, vmem_limit=vmem_limit)
    return x_halo[:, pad:pad + seq_len, :].astype(jnp.float32)


# --------------------------------------------------------------------------
# Pure-JAX reference (mirrors the PyTorch module math) for validation
# --------------------------------------------------------------------------
def reference_forward(params, freqs_cis, text_ids, seq_len):
    x = jnp.take(params["embed"], text_ids, axis=0)
    pos_idx = jnp.minimum(jnp.arange(seq_len), PRECOMPUTE_MAX_POS - 1)
    x = x + jnp.take(freqs_cis, pos_idx, axis=0)[None]
    for blk in params["blocks"]:
        pd, ph = blk["pd"], blk["ph"]
        w1 = blk["w1"].astype(jnp.float32)
        w2 = blk["w2"].astype(jnp.float32)
        res = x
        xp = jnp.pad(x, ((0, 0), (3, 3), (0, 0)))
        y = sum(xp[:, k:k + seq_len, :] * pd[k] for k in range(7)) + pd[7]
        mean = y.mean(-1, keepdims=True)
        var = ((y - mean) ** 2).mean(-1, keepdims=True)
        y = (y - mean) * jax.lax.rsqrt(var + 1e-6) * pd[8] + pd[9]
        h = y @ w1 + ph[0]
        h = 0.5 * h * (1.0 + jax.lax.erf(h / math.sqrt(2.0)))
        gx = jnp.sqrt(jnp.sum(h * h, axis=1, keepdims=True))
        nx = gx / (jnp.mean(gx, axis=-1, keepdims=True) + 1e-6)
        g = ph[1] * (h * nx) + ph[2] + h
        x = res + g @ w2 + pd[10]
    return x


if __name__ == "__main__":
    # Small config consistent with the module: TextEmbedding(16, 128, conv_layers=2, conv_mult=2).
    # D = 128 keeps the lane axis dense; seq_len = 24 (n_pad = 32) exercises the
    # padded-tail masking path.
    text_num_embeds, text_dim, conv_layers, conv_mult = 16, 128, 2, 2
    B, seq_len = 2, 24

    key = jax.random.PRNGKey(0)
    pkey, tkey = jax.random.split(key)
    params = init_params(pkey, text_num_embeds, text_dim, conv_layers, conv_mult)
    freqs_cis = precompute_freqs_cis(text_dim, PRECOMPUTE_MAX_POS)
    text_ids = jax.random.randint(tkey, (B, seq_len), 0, text_num_embeds + 1, dtype=jnp.int32)

    out = text_embedding_forward(params, freqs_cis, text_ids, seq_len=seq_len)
    out = jax.block_until_ready(out)

    assert out.shape == (B, seq_len, text_dim), out.shape
    assert bool(jnp.all(jnp.isfinite(out)))

    # Validate against the f32 reference. Tolerance is loose because the kernel
    # carries the residual stream in bf16 and runs the pointwise-conv matmuls
    # with bf16 operands (f32 accumulation).
    ref = reference_forward(params, freqs_cis, text_ids, seq_len)
    np.testing.assert_allclose(np.asarray(out), np.asarray(ref), atol=1e-1, rtol=5e-2)

    print("KERNEL_OK")
</pallas_src>

<mosaic_0001>
module attributes {stable_mosaic.version = 11 : i64} {
  func.func @_convnext_block_kernel(%arg0: i32, %arg1: memref<1x64x128xbf16, #tpu.memory_space<vmem>>, %arg2: memref<16x128xf32, #tpu.memory_space<vmem>>, %arg3: memref<8x256xf32, #tpu.memory_space<vmem>>, %arg4: memref<128x256xbf16, #tpu.memory_space<vmem>>, %arg5: memref<256x128xbf16, #tpu.memory_space<vmem>>, %arg6: memref<1x64x128xbf16, #tpu.memory_space<vmem>>) attributes {dimension_semantics = [#tpu.dimension_semantics<parallel>], iteration_bounds = array<i64: 2>, scalar_prefetch = 0 : i64, scratch_operands = 0 : i64, tpu.core_type = #tpu.core_type<tc>, window_params = [{transform_indices = @transform_0, window_bounds = array<i64: 1, 64, 128>}, {pipeline_mode = #tpu.pipeline_mode<synchronous>, transform_indices = @transform_1, window_bounds = array<i64: 16, 128>}, {pipeline_mode = #tpu.pipeline_mode<synchronous>, transform_indices = @transform_2, window_bounds = array<i64: 8, 256>}, {pipeline_mode = #tpu.pipeline_mode<synchronous>, transform_indices = @transform_3, window_bounds = array<i64: 128, 256>}, {pipeline_mode = #tpu.pipeline_mode<synchronous>, transform_indices = @transform_4, window_bounds = array<i64: 256, 128>}, {transform_indices = @transform_5, window_bounds = array<i64: 1, 64, 128>}]} {
    %c0 = arith.constant 0 : index
    %c0_0 = arith.constant 0 : index
    %c0_1 = arith.constant 0 : index
    %0 = vector.load %arg1[%c0, %c0_0, %c0_1] : memref<1x64x128xbf16, #tpu.memory_space<vmem>>, vector<1x64x128xbf16>
    %1 = vector.shape_cast %0 : vector<1x64x128xbf16> to vector<64x128xbf16>
    %2 = arith.extf %1 : vector<64x128xbf16> to vector<64x128xf32>
    %cst = arith.constant 0.000000e+00 : f32
    %3 = vector.broadcast %cst : f32 to vector<32x128xf32>
    %c51_i32 = arith.constant 51 : i32
    %4 = tpu.dynamic_rotate %2 by %c51_i32 dim 0 : vector<64x128xf32>, i32 -> vector<64x128xf32>
    %5 = vector.extract_strided_slice %4 {offsets = [0, 0], sizes = [32, 128], strides = [1, 1]} : vector<64x128xf32> to vector<32x128xf32>
    %c0_2 = arith.constant 0 : index
    %c0_3 = arith.constant 0 : index
    %6 = vector.load %arg2[%c0_2, %c0_3] : memref<16x128xf32, #tpu.memory_space<vmem>>, vector<1x128xf32>
    %7 = vector.broadcast %6 : vector<1x128xf32> to vector<32x128xf32>
    %8 = arith.mulf %5, %7 : vector<32x128xf32>
    %9 = arith.addf %3, %8 : vector<32x128xf32>
    %c50_i32 = arith.constant 50 : i32
    %10 = tpu.dynamic_rotate %2 by %c50_i32 dim 0 : vector<64x128xf32>, i32 -> vector<64x128xf32>
    %11 = vector.extract_strided_slice %10 {offsets = [0, 0], sizes = [32, 128], strides = [1, 1]} : vector<64x128xf32> to vector<32x128xf32>
    %c1 = arith.constant 1 : index
    %c0_4 = arith.constant 0 : index
    %12 = vector.load %arg2[%c1, %c0_4] : memref<16x128xf32, #tpu.memory_space<vmem>>, vector<1x128xf32>
    %13 = vector.broadcast %12 : vector<1x128xf32> to vector<32x128xf32>
    %14 = arith.mulf %11, %13 : vector<32x128xf32>
    %15 = arith.addf %9, %14 : vector<32x128xf32>
    %c49_i32 = arith.constant 49 : i32
    %16 = tpu.dynamic_rotate %2 by %c49_i32 dim 0 : vector<64x128xf32>, i32 -> vector<64x128xf32>
    %17 = vector.extract_strided_slice %16 {offsets = [0, 0], sizes = [32, 128], strides = [1, 1]} : vector<64x128xf32> to vector<32x128xf32>
    %c2 = arith.constant 2 : index
    %c0_5 = arith.constant 0 : index
    %18 = vector.load %arg2[%c2, %c0_5] : memref<16x128xf32, #tpu.memory_space<vmem>>, vector<1x128xf32>
    %19 = vector.broadcast %18 : vector<1x128xf32> to vector<32x128xf32>
    %20 = arith.mulf %17, %19 : vector<32x128xf32>
    %21 = arith.addf %15, %20 : vector<32x128xf32>
    %c48_i32 = arith.constant 48 : i32
    %22 = tpu.dynamic_rotate %2 by %c48_i32 dim 0 : vector<64x128xf32>, i32 -> vector<64x128xf32>
    %23 = vector.extract_strided_slice %22 {offsets = [0, 0], sizes = [32, 128], strides = [1, 1]} : vector<64x128xf32> to vector<32x128xf32>
    %c3 = arith.constant 3 : index
    %c0_6 = arith.constant 0 : index
    %24 = vector.load %arg2[%c3, %c0_6] : memref<16x128xf32, #tpu.memory_space<vmem>>, vector<1x128xf32>
    %25 = vector.broadcast %24 : vector<1x128xf32> to vector<32x128xf32>
    %26 = arith.mulf %23, %25 : vector<32x128xf32>
    %27 = arith.addf %21, %26 : vector<32x128xf32>
    %c47_i32 = arith.constant 47 : i32
    %28 = tpu.dynamic_rotate %2 by %c47_i32 dim 0 : vector<64x128xf32>, i32 -> vector<64x128xf32>
    %29 = vector.extract_strided_slice %28 {offsets = [0, 0], sizes = [32, 128], strides = [1, 1]} : vector<64x128xf32> to vector<32x128xf32>
    %c4 = arith.constant 4 : index
    %c0_7 = arith.constant 0 : index
    %30 = vector.load %arg2[%c4, %c0_7] : memref<16x128xf32, #tpu.memory_space<vmem>>, vector<1x128xf32>
    %31 = vector.broadcast %30 : vector<1x128xf32> to vector<32x128xf32>
    %32 = arith.mulf %29, %31 : vector<32x128xf32>
    %33 = arith.addf %27, %32 : vector<32x128xf32>
    %c46_i32 = arith.constant 46 : i32
    %34 = tpu.dynamic_rotate %2 by %c46_i32 dim 0 : vector<64x128xf32>, i32 -> vector<64x128xf32>
    %35 = vector.extract_strided_slice %34 {offsets = [0, 0], sizes = [32, 128], strides = [1, 1]} : vector<64x128xf32> to vector<32x128xf32>
    %c5 = arith.constant 5 : index
    %c0_8 = arith.constant 0 : index
    %36 = vector.load %arg2[%c5, %c0_8] : memref<16x128xf32, #tpu.memory_space<vmem>>, vector<1x128xf32>
    %37 = vector.broadcast %36 : vector<1x128xf32> to vector<32x128xf32>
    %38 = arith.mulf %35, %37 : vector<32x128xf32>
    %39 = arith.addf %33, %38 : vector<32x128xf32>
    %c45_i32 = arith.constant 45 : i32
    %40 = tpu.dynamic_rotate %2 by %c45_i32 dim 0 : vector<64x128xf32>, i32 -> vector<64x128xf32>
    %41 = vector.extract_strided_slice %40 {offsets = [0, 0], sizes = [32, 128], strides = [1, 1]} : vector<64x128xf32> to vector<32x128xf32>
    %c6 = arith.constant 6 : index
    %c0_9 = arith.constant 0 : index
    %42 = vector.load %arg2[%c6, %c0_9] : memref<16x128xf32, #tpu.memory_space<vmem>>, vector<1x128xf32>
    %43 = vector.broadcast %42 : vector<1x128xf32> to vector<32x128xf32>
    %44 = arith.mulf %41, %43 : vector<32x128xf32>
    %45 = arith.addf %39, %44 : vector<32x128xf32>
    %c7 = arith.constant 7 : index
    %c0_10 = arith.constant 0 : index
    %46 = vector.load %arg2[%c7, %c0_10] : memref<16x128xf32, #tpu.memory_space<vmem>>, vector<1x128xf32>
    %47 = vector.broadcast %46 : vector<1x128xf32> to vector<32x128xf32>
    %48 = arith.addf %45, %47 : vector<32x128xf32>
    %cst_11 = arith.constant dense<0.000000e+00> : vector<32xf32>
    %49 = vector.multi_reduction <add>, %48, %cst_11 [1] : vector<32x128xf32> to vector<32xf32>
    %50 = vector.shape_cast %49 : vector<32xf32> to vector<32x1xf32>
    %cst_12 = arith.constant 1.280000e+02 : f32
    %51 = vector.broadcast %cst_12 : f32 to vector<32x1xf32>
    %52 = arith.divf %50, %51 : vector<32x1xf32>
    %53 = vector.broadcast %52 : vector<32x1xf32> to vector<32x128xf32>
    %54 = arith.subf %48, %53 : vector<32x128xf32>
    %55 = arith.mulf %54, %54 : vector<32x128xf32>
    %cst_13 = arith.constant dense<0.000000e+00> : vector<32xf32>
    %56 = vector.multi_reduction <add>, %55, %cst_13 [1] : vector<32x128xf32> to vector<32xf32>
    %57 = vector.shape_cast %56 : vector<32xf32> to vector<32x1xf32>
    %cst_14 = arith.constant 1.280000e+02 : f32
    %58 = vector.broadcast %cst_14 : f32 to vector<32x1xf32>
    %59 = arith.divf %57, %58 : vector<32x1xf32>
    %60 = vector.broadcast %52 : vector<32x1xf32> to vector<32x128xf32>
    %61 = arith.subf %48, %60 : vector<32x128xf32>
    %cst_15 = arith.constant 9.99999997E-7 : f32
    %62 = vector.broadcast %cst_15 : f32 to vector<32x1xf32>
    %63 = arith.addf %59, %62 : vector<32x1xf32>
    %64 = math.rsqrt %63 : vector<32x1xf32>
    %65 = vector.broadcast %64 : vector<32x1xf32> to vector<32x128xf32>
    %66 = arith.mulf %61, %65 : vector<32x128xf32>
    %c8 = arith.constant 8 : index
    %c0_16 = arith.constant 0 : index
    %67 = vector.load %arg2[%c8, %c0_16] : memref<16x128xf32, #tpu.memory_space<vmem>>, vector<1x128xf32>
    %68 = vector.broadcast %67 : vector<1x128xf32> to vector<32x128xf32>
    %69 = arith.mulf %66, %68 : vector<32x128xf32>
    %c9 = arith.constant 9 : index
    %c0_17 = arith.constant 0 : index
    %70 = vector.load %arg2[%c9, %c0_17] : memref<16x128xf32, #tpu.memory_space<vmem>>, vector<1x128xf32>
    %71 = vector.broadcast %70 : vector<1x128xf32> to vector<32x128xf32>
    %72 = arith.addf %69, %71 : vector<32x128xf32>
    %73 = arith.truncf %72 : vector<32x128xf32> to vector<32x128xbf16>
    %c0_18 = arith.constant 0 : index
    %c0_19 = arith.constant 0 : index
    %74 = vector.load %arg4[%c0_18, %c0_19] : memref<128x256xbf16, #tpu.memory_space<vmem>>, vector<128x256xbf16>
    %cst_20 = arith.constant dense<0.000000e+00> : vector<32x256xf32>
    %75 = tpu.matmul %73, %74, %cst_20 {dimension_numbers = #tpu.dot_dimension_numbers<[1], [0], [0], [1], [0, 0, 1, 1], [], []>} : vector<32x128xbf16>, vector<128x256xbf16>, vector<32x256xf32> -> vector<32x256xf32>
    %c0_21 = arith.constant 0 : index
    %c0_22 = arith.constant 0 : index
    %76 = vector.load %arg3[%c0_21, %c0_22] : memref<8x256xf32, #tpu.memory_space<vmem>>, vector<1x256xf32>
    %77 = vector.broadcast %76 : vector<1x256xf32> to vector<32x256xf32>
    %78 = arith.addf %75, %77 : vector<32x256xf32>
    %cst_23 = arith.constant 5.000000e-01 : f32
    %79 = vector.broadcast %cst_23 : f32 to vector<32x256xf32>
    %80 = arith.mulf %79, %78 : vector<32x256xf32>
    %cst_24 = arith.constant 0.707106769 : f32
    %81 = vector.broadcast %cst_24 : f32 to vector<32x256xf32>
    %82 = arith.mulf %78, %81 : vector<32x256xf32>
    %83 = math.erf %82 : vector<32x256xf32>
    %cst_25 = arith.constant 1.000000e+00 : f32
    %84 = vector.broadcast %cst_25 : f32 to vector<32x256xf32>
    %85 = arith.addf %84, %83 : vector<32x256xf32>
    %86 = arith.mulf %80, %85 : vector<32x256xf32>
    %87 = tpu.iota {dimensions = array<i32: 0>} : vector<32x1xi32>
    %c24_i32 = arith.constant 24 : i32
    %88 = vector.broadcast %c24_i32 : i32 to vector<32x1xi32>
    %89 = arith.cmpi slt, %87, %88 : vector<32x1xi32>
    %cst_26 = arith.constant 0.000000e+00 : f32
    %90 = vector.shape_cast %89 : vector<32x1xi1> to vector<32x1xi1>
    %91 = vector.broadcast %90 : vector<32x1xi1> to vector<32x256xi1>
    %92 = vector.broadcast %cst_26 : f32 to vector<32x256xf32>
    %93 = arith.select %91, %86, %92 : vector<32x256xi1>, vector<32x256xf32>
    %94 = arith.mulf %93, %93 : vector<32x256xf32>
    %cst_27 = arith.constant dense<0.000000e+00> : vector<256xf32>
    %95 = vector.multi_reduction <add>, %94, %cst_27 [0] : vector<32x256xf32> to vector<256xf32>
    %96 = vector.shape_cast %95 : vector<256xf32> to vector<1x256xf32>
    %97 = math.sqrt %96 : vector<1x256xf32>
    %cst_28 = arith.constant dense<0.000000e+00> : vector<1xf32>
    %98 = vector.multi_reduction <add>, %97, %cst_28 [1] : vector<1x256xf32> to vector<1xf32>
    %99 = vector.shape_cast %98 : vector<1xf32> to vector<1x1xf32>
    %cst_29 = arith.constant 2.560000e+02 : f32
    %100 = vector.broadcast %cst_29 : f32 to vector<1x1xf32>
    %101 = arith.divf %99, %100 : vector<1x1xf32>
    %cst_30 = arith.constant 9.99999997E-7 : f32
    %102 = vector.broadcast %cst_30 : f32 to vector<1x1xf32>
    %103 = arith.addf %101, %102 : vector<1x1xf32>
    %104 = vector.broadcast %103 : vector<1x1xf32> to vector<1x256xf32>
    %105 = arith.divf %97, %104 : vector<1x256xf32>
    %c1_31 = arith.constant 1 : index
    %c0_32 = arith.constant 0 : index
    %106 = vector.load %arg3[%c1_31, %c0_32] : memref<8x256xf32, #tpu.memory_space<vmem>>, vector<1x256xf32>
    %107 = arith.mulf %106, %105 : vector<1x256xf32>
    %cst_33 = arith.constant 1.000000e+00 : f32
    %108 = vector.broadcast %cst_33 : f32 to vector<1x256xf32>
    %109 = arith.addf %107, %108 : vector<1x256xf32>
    %110 = vector.broadcast %109 : vector<1x256xf32> to vector<32x256xf32>
    %111 = arith.mulf %86, %110 : vector<32x256xf32>
    %c2_34 = arith.constant 2 : index
    %c0_35 = arith.constant 0 : index
    %112 = vector.load %arg3[%c2_34, %c0_35] : memref<8x256xf32, #tpu.memory_space<vmem>>, vector<1x256xf32>
    %113 = vector.broadcast %112 : vector<1x256xf32> to vector<32x256xf32>
    %114 = arith.addf %111, %113 : vector<32x256xf32>
    %115 = arith.truncf %114 : vector<32x256xf32> to vector<32x256xbf16>
    %c0_36 = arith.constant 0 : index
    %c0_37 = arith.constant 0 : index
    %116 = vector.load %arg5[%c0_36, %c0_37] : memref<256x128xbf16, #tpu.memory_space<vmem>>, vector<256x128xbf16>
    %cst_38 = arith.constant dense<0.000000e+00> : vector<32x128xf32>
    %117 = tpu.matmul %115, %116, %cst_38 {dimension_numbers = #tpu.dot_dimension_numbers<[1], [0], [0], [1], [0, 0, 1, 1], [], []>} : vector<32x256xbf16>, vector<256x128xbf16>, vector<32x128xf32> -> vector<32x128xf32>
    %c10 = arith.constant 10 : index
    %c0_39 = arith.constant 0 : index
    %118 = vector.load %arg2[%c10, %c0_39] : memref<16x128xf32, #tpu.memory_space<vmem>>, vector<1x128xf32>
    %119 = vector.broadcast %118 : vector<1x128xf32> to vector<32x128xf32>
    %120 = arith.addf %117, %119 : vector<32x128xf32>
    %c0_40 = arith.constant 0 : index
    %c16 = arith.constant 16 : index
    %c0_41 = arith.constant 0 : index
    %121 = vector.load %arg1[%c0_40, %c16, %c0_41] : memref<1x64x128xbf16, #tpu.memory_space<vmem>>, vector<1x32x128xbf16>
    %122 = vector.shape_cast %121 : vector<1x32x128xbf16> to vector<32x128xbf16>
    %123 = arith.extf %122 : vector<32x128xbf16> to vector<32x128xf32>
    %124 = arith.addf %123, %120 : vector<32x128xf32>
    %c24_i32_42 = arith.constant 24 : i32
    %125 = vector.broadcast %c24_i32_42 : i32 to vector<32x1xi32>
    %126 = arith.cmpi slt, %87, %125 : vector<32x1xi32>
    %cst_43 = arith.constant 0.000000e+00 : f32
    %127 = vector.shape_cast %126 : vector<32x1xi1> to vector<32x1xi1>
    %128 = vector.broadcast %127 : vector<32x1xi1> to vector<32x128xi1>
    %129 = vector.broadcast %cst_43 : f32 to vector<32x128xf32>
    %130 = arith.select %128, %124, %129 : vector<32x128xi1>, vector<32x128xf32>
    %131 = arith.truncf %130 : vector<32x128xf32> to vector<32x128xbf16>
    %c0_44 = arith.constant 0 : index
    %c16_45 = arith.constant 16 : index
    %c0_46 = arith.constant 0 : index
    %132 = vector.load %arg6[%c0_44, %c16_45, %c0_46] : memref<1x64x128xbf16, #tpu.memory_space<vmem>>, vector<1x32x128xbf16>
    %133 = vector.shape_cast %132 : vector<1x32x128xbf16> to vector<32x128xbf16>
    %134 = vector.shape_cast %131 : vector<32x128xbf16> to vector<1x32x128xbf16>
    tpu.vector_store %arg6[%c0_44, %c16_45, %c0_46], %134 {strides = array<i32>} : memref<1x64x128xbf16, #tpu.memory_space<vmem>>, vector<1x32x128xbf16>,
    %cst_47 = arith.constant 0.000000e+00 : bf16
    %135 = vector.broadcast %cst_47 : bf16 to vector<16x128xbf16>
    %c0_48 = arith.constant 0 : index
    %c0_49 = arith.constant 0 : index
    %c0_50 = arith.constant 0 : index
    %136 = vector.load %arg6[%c0_48, %c0_49, %c0_50] : memref<1x64x128xbf16, #tpu.memory_space<vmem>>, vector<1x16x128xbf16>
    %137 = vector.shape_cast %136 : vector<1x16x128xbf16> to vector<16x128xbf16>
    %138 = vector.shape_cast %135 : vector<16x128xbf16> to vector<1x16x128xbf16>
    tpu.vector_store %arg6[%c0_48, %c0_49, %c0_50], %138 {strides = array<i32>} : memref<1x64x128xbf16, #tpu.memory_space<vmem>>, vector<1x16x128xbf16>,
    %cst_51 = arith.constant 0.000000e+00 : bf16
    %139 = vector.broadcast %cst_51 : bf16 to vector<16x128xbf16>
    %c0_52 = arith.constant 0 : index
    %c48 = arith.constant 48 : index
    %c0_53 = arith.constant 0 : index
    %140 = vector.load %arg6[%c0_52, %c48, %c0_53] : memref<1x64x128xbf16, #tpu.memory_space<vmem>>, vector<1x16x128xbf16>
    %141 = vector.shape_cast %140 : vector<1x16x128xbf16> to vector<16x128xbf16>
    %142 = vector.shape_cast %139 : vector<16x128xbf16> to vector<1x16x128xbf16>
    tpu.vector_store %arg6[%c0_52, %c48, %c0_53], %142 {strides = array<i32>} : memref<1x64x128xbf16, #tpu.memory_space<vmem>>, vector<1x16x128xbf16>,
    return
  }
  func.func @transform_0(%arg0: i32) -> (i32, i32, i32) {
    %c0_i32 = arith.constant 0 : i32
    %c0_i32_0 = arith.constant 0 : i32
    %c0_i32_1 = arith.constant 0 : i32
    return %arg0, %c0_i32, %c0_i32_0 : i32, i32, i32
  }
  func.func @transform_1(%arg0: i32) -> (i32, i32) {
    %c0_i32 = arith.constant 0 : i32
    %c0_i32_0 = arith.constant 0 : i32
    %c0_i32_1 = arith.constant 0 : i32
    return %c0_i32, %c0_i32_0 : i32, i32
  }
  func.func @transform_2(%arg0: i32) -> (i32, i32) {
    %c0_i32 = arith.constant 0 : i32
    %c0_i32_0 = arith.constant 0 : i32
    %c0_i32_1 = arith.constant 0 : i32
    return %c0_i32, %c0_i32_0 : i32, i32
  }
  func.func @transform_3(%arg0: i32) -> (i32, i32) {
    %c0_i32 = arith.constant 0 : i32
    %c0_i32_0 = arith.constant 0 : i32
    %c0_i32_1 = arith.constant 0 : i32
    return %c0_i32, %c0_i32_0 : i32, i32
  }
  func.func @transform_4(%arg0: i32) -> (i32, i32) {
    %c0_i32 = arith.constant 0 : i32
    %c0_i32_0 = arith.constant 0 : i32
    %c0_i32_1 = arith.constant 0 : i32
    return %c0_i32, %c0_i32_0 : i32, i32
  }
  func.func @transform_5(%arg0: i32) -> (i32, i32, i32) {
    %c0_i32 = arith.constant 0 : i32
    %c0_i32_0 = arith.constant 0 : i32
    %c0_i32_1 = arith.constant 0 : i32
    return %arg0, %c0_i32, %c0_i32_0 : i32, i32, i32
  }
}

</mosaic_0001>

<llo_original>
// kernel: text_embedding_forward.2
$region0: #{text_embedding_forward.2}
  #allocation0 [shape = 'u32[]', space=smem, size = 0x4, offset = 0x4, fixed_abs, tag = 'smem constant byte address 0x4 - core index']
  #allocation1 [shape = 'u32[144,128]{1,0:T(1,128)}', space=vmem, size = 0x12000, scoped, tag = 'internal scratch']
  %s0 = inlined_call_operand.vmem [shape: bf16[2,64,128], index: 0, kind: input, shape index: {}, may-alias: {0,5}]
  %s1 = inlined_call_operand.hbm [shape: f32[16,128], index: 1, kind: input, shape index: {}]
  %s2 = inlined_call_operand.hbm [shape: f32[8,256], index: 2, kind: input, shape index: {}]
  %s3 = inlined_call_operand.hbm [shape: bf16[128,256], index: 3, kind: input, shape index: {}]
  %s4 = inlined_call_operand.hbm [shape: bf16[256,128], index: 4, kind: input, shape index: {}]
  %s5 = inlined_call_operand.vmem [shape: bf16[2,64,128], index: 5, kind: output, shape index: {}, may-alias: {0,5}]
  %s6 = sld [smem:[#allocation0]]
  $region69: #{text_embedding_forward.2} parent=0
    _
  %s8 = ssub.s32 1, %s6
  %s9 = scalar_select 0, %s8, %s6
  $region1: #{text_embedding_forward.2} parent=0
    #allocation2 [shape = 'u8[8192]{0}', space=vmem, size = 0x2000, scoped, tag = 'input window, operand 1, single buffered']
    #allocation3 [shape = 's32[2]{0}', space=sflag, size = 0x8, scoped, tag = 'scoped memory for text_embedding_forward.2']
    #allocation4 [shape = 'u8[8192]{0}', space=vmem, size = 0x2000, scoped, tag = 'input window, operand 2, single buffered']
    #allocation5 [shape = 's32[1]{0}', space=sflag, size = 0x4, scoped, tag = 'scoped memory for text_embedding_forward.2']
    #allocation6 [shape = 'u8[65536]{0}', space=vmem, size = 0x10000, scoped, tag = 'input window, operand 3, single buffered']
    #allocation7 [shape = 'u8[65536]{0}', space=vmem, size = 0x10000, scoped, tag = 'input window, operand 4, single buffered']
    #allocation8 [shape = 's32[1]{0}', space=sflag, size = 0x4, scoped, tag = 'scoped memory for text_embedding_forward.2']
    %10 = vsyncpa [#allocation3], 0
    %11 = vsyncpa [#allocation5], 0
    %12 = vsyncpa [#allocation8], 0
    loop: start=0, step=1, limit=4
    $region2: #{text_embedding_forward.2} parent=1 // loop_pre_header
      _
    $region3: #{text_embedding_forward.2} parent=1 // loop_header
      %s14 = sphi 0, %s18
      %p15 = scmp.ge.s32.totalorder %s14, 4
      %s24 = sphi 0, %s26
      %s27 = sphi 0, %s24
      %s28 = sphi 0, %s27
      %s44 = sphi 0, %s28
      %s48 = sphi 0, %s48
      %s50 = sphi 0, %s48
      %s51 = sphi 0, %s50
      %s65 = sphi 0, %s51
      %s69 = sphi 0, %s69
      %s71 = sphi 0, %s69
      %s72 = sphi 0, %s71
      %s86 = sphi 0, %s72
      %s90 = sphi 0, %s90
      %s92 = sphi 0, %s90
      %s93 = sphi 0, %s92
      %s107 = sphi 0, %s93
      %s111 = sphi 0, %s111
      %s113 = sphi 0, %s111
      %s114 = sphi 0, %s113
      %s128 = sphi 0, %s114
      %s134 = sphi 0, %s136
      %s137 = sphi 0, %s134
      %s138 = sphi 0, %s137
      %s154 = sphi 0, %s138
    $region4: #{text_embedding_forward.2} parent=1 // loop_header_branch
      %17 = sbr.rel (%p15) target = $region8
    $region5: #{text_embedding_forward.2} parent=1 // loop_body
      %s19 = ssub.s32 %s14, 1
      %s20 = ssub.s32 %s14, 2
      %s21 = sadd.s32 %s14, 1
      %s22 = ssub.s32 %s14, %s21
      %p23 = scmp.eq.s32.totalorder %s22, 0
      %s25 = sadd.s32 %s24, 1
      %s26 = scalar_select %p23, %s24, %s25
      %p29 = pneg %p23
      %p30 = scmp.eq.s32.totalorder %s14, 1
      %p31 = por %p29, %p30
      %p32 = scmp.ne.s32.totalorder %s24, %s27
      %p33 = scmp.eq.s32.totalorder %s14, 0
      %p34 = por %p32, %p33
      %p35 = scmp.ne.s32.totalorder %s24, %s27
      %p36 = scmp.eq.s32.totalorder %s19, 1
      %p37 = por %p35, %p36
      %p38 = scmp.ne.s32.totalorder %s27, %s28
      %p39 = scmp.eq.s32.totalorder %s19, 0
      %p40 = por %p38, %p39
      %p41 = scmp.ne.s32.totalorder %s27, %s28
      %p42 = scmp.eq.s32.totalorder %s20, 1
      %p43 = por %p41, %p42
      %p45 = scmp.ne.s32.totalorder %s28, %s44
      %p46 = scmp.eq.s32.totalorder %s20, 0
      %p47 = por %p45, %p46
      %s49 = sadd.s32 %s48, 1
      %p52 = scmp.eq.s32.totalorder %s14, 1
      %p53 = scmp.ne.s32.totalorder %s48, %s50
      %p54 = scmp.eq.s32.totalorder %s14, 0
      %p55 = por %p53, %p54
      %p56 = scmp.ne.s32.totalorder %s48, %s50
      %p57 = scmp.eq.s32.totalorder %s19, 1
      %p58 = por %p56, %p57
      %p59 = scmp.ne.s32.totalorder %s50, %s51
      %p60 = scmp.eq.s32.totalorder %s19, 0
      %p61 = por %p59, %p60
      %p62 = scmp.ne.s32.totalorder %s50, %s51
      %p63 = scmp.eq.s32.totalorder %s20, 1
      %p64 = por %p62, %p63
      %p66 = scmp.ne.s32.totalorder %s51, %s65
      %p67 = scmp.eq.s32.totalorder %s20, 0
      %p68 = por %p66, %p67
      %s70 = sadd.s32 %s69, 1
      %p73 = scmp.eq.s32.totalorder %s14, 1
      %p74 = scmp.ne.s32.totalorder %s69, %s71
      %p75 = scmp.eq.s32.totalorder %s14, 0
      %p76 = por %p74, %p75
      %p77 = scmp.ne.s32.totalorder %s69, %s71
      %p78 = scmp.eq.s32.totalorder %s19, 1
      %p79 = por %p77, %p78
      %p80 = scmp.ne.s32.totalorder %s71, %s72
      %p81 = scmp.eq.s32.totalorder %s19, 0
      %p82 = por %p80, %p81
      %p83 = scmp.ne.s32.totalorder %s71, %s72
      %p84 = scmp.eq.s32.totalorder %s20, 1
      %p85 = por %p83, %p84
      %p87 = scmp.ne.s32.totalorder %s72, %s86
      %p88 = scmp.eq.s32.totalorder %s20, 0
      %p89 = por %p87, %p88
      %s91 = sadd.s32 %s90, 1
      %p94 = scmp.eq.s32.totalorder %s14, 1
      %p95 = scmp.ne.s32.totalorder %s90, %s92
      %p96 = scmp.eq.s32.totalorder %s14, 0
      %p97 = por %p95, %p96
      %p98 = scmp.ne.s32.totalorder %s90, %s92
      %p99 = scmp.eq.s32.totalorder %s19, 1
      %p100 = por %p98, %p99
      %p101 = scmp.ne.s32.totalorder %s92, %s93
      %p102 = scmp.eq.s32.totalorder %s19, 0
      %p103 = por %p101, %p102
      %p104 = scmp.ne.s32.totalorder %s92, %s93
      %p105 = scmp.eq.s32.totalorder %s20, 1
      %p106 = por %p104, %p105
      %p108 = scmp.ne.s32.totalorder %s93, %s107
      %p109 = scmp.eq.s32.totalorder %s20, 0
      %p110 = por %p108, %p109
      %s112 = sadd.s32 %s111, 1
      %p115 = scmp.eq.s32.totalorder %s14, 1
      %p116 = scmp.ne.s32.totalorder %s111, %s113
      %p117 = scmp.eq.s32.totalorder %s14, 0
      %p118 = por %p116, %p117
      %p119 = scmp.ne.s32.totalorder %s111, %s113
      %p120 = scmp.eq.s32.totalorder %s19, 1
      %p121 = por %p119, %p120
      %p122 = scmp.ne.s32.totalorder %s113, %s114
      %p123 = scmp.eq.s32.totalorder %s19, 0
      %p124 = por %p122, %p123
      %p125 = scmp.ne.s32.totalorder %s113, %s114
      %p126 = scmp.eq.s32.totalorder %s20, 1
      %p127 = por %p125, %p126
      %p129 = scmp.ne.s32.totalorder %s114, %s128
      %p130 = scmp.eq.s32.totalorder %s20, 0
      %p131 = por %p129, %p130
      %s132 = ssub.s32 %s14, %s21
      %p133 = scmp.eq.s32.totalorder %s132, 0
      %s135 = sadd.s32 %s134, 1
      %s136 = scalar_select %p133, %s134, %s135
      %p139 = pneg %p133
      %p140 = scmp.eq.s32.totalorder %s14, 1
      %p141 = por %p139, %p140
      %p142 = scmp.ne.s32.totalorder %s134, %s137
      %p143 = scmp.eq.s32.totalorder %s14, 0
      %p144 = por %p142, %p143
      %p145 = scmp.ne.s32.totalorder %s134, %s137
      %p146 = scmp.eq.s32.totalorder %s19, 1
      %p147 = por %p145, %p146
      %p148 = scmp.ne.s32.totalorder %s137, %s138
      %p149 = scmp.eq.s32.totalorder %s19, 0
      %p150 = por %p148, %p149
      %p151 = scmp.ne.s32.totalorder %s137, %s138
      %p152 = scmp.eq.s32.totalorder %s20, 1
      %p153 = por %p151, %p152
      %p155 = scmp.ne.s32.totalorder %s138, %s154
      %p156 = scmp.eq.s32.totalorder %s20, 0
      %p157 = por %p155, %p156
      %p158 = scmp.le.s32.totalorder 1, %s14
      %p159 = scmp.lt.s32.totalorder %s14, 3
      %p160 = pnand %p158, %p159
      %p161 = pneg %p160
      // Predicated region
      $region9: #{text_embedding_forward.2} parent=5 // pred_check
        _
      $region10: #{text_embedding_forward.2} parent=5 // pred_check_branch
        %163 = sbr.rel (%p160) target = $region12
      $region11: #{text_embedding_forward.2} parent=5 // pred_region
        %s164 = ssub.s32 %s14, 1
        // Predicated region
        $region13: #{text_embedding_forward.2} parent=11 // pred_check
          %p165 = pneg %p61
        $region14: #{text_embedding_forward.2} parent=11 // pred_check_branch
          %167 = sbr.rel (%p165) target = $region16
        $region15: #{text_embedding_forward.2} parent=11 // pred_region
          %s169 = ssub.s32 256, 256
          %170 = vsyncadd [#allocation3], %s169
          %s171 = sshll.u32 [#allocation2], 4
          %s172 = int_to_ptr.vmem [resolvable:$true] %s171
          %177 = dma.hbm_to_vmem [thread:$0]  %s1, 256, %s172, [#allocation3], 128, 128, 8
        $region16: #{text_embedding_forward.2} parent=11 // pred_fallthru
          _
        // Predicated region
        $region17: #{text_embedding_forward.2} parent=11 // pred_check
          %p178 = pneg %p82
        $region18: #{text_embedding_forward.2} parent=11 // pred_check_branch
          %180 = sbr.rel (%p178) target = $region20
        $region19: #{text_embedding_forward.2} parent=11 // pred_region
          %s182 = ssub.s32 256, 256
          %183 = vsyncadd [#allocation5], %s182
          %s185 = sshll.u32 [#allocation4], 4
          %s186 = int_to_ptr.vmem [resolvable:$true] %s185
          %188 = dma.hbm_to_vmem [thread:$0]  %s2, 256, %s186, [#allocation5]
        $region20: #{text_embedding_forward.2} parent=11 // pred_fallthru
          _
        // Predicated region
        $region21: #{text_embedding_forward.2} parent=11 // pred_check
          %p189 = pneg %p103
        $region22: #{text_embedding_forward.2} parent=11 // pred_check_branch
          %191 = sbr.rel (%p189) target = $region24
        $region23: #{text_embedding_forward.2} parent=11 // pred_region
          %s193 = ssub.s32 2048, 2048
          %194 = vsyncadd [#allocation5], %s193
          %s195 = sshll.u32 [#allocation6], 4
          %s196 = int_to_ptr.vmem [resolvable:$true] %s195
          %201 = dma.hbm_to_vmem [thread:$0]  %s3, 2048, %s196, [#allocation5], 128, 128, 8
        $region24: #{text_embedding_forward.2} parent=11 // pred_fallthru
          _
        // Predicated region
        $region25: #{text_embedding_forward.2} parent=11 // pred_check
          %p202 = pneg %p124
        $region26: #{text_embedding_forward.2} parent=11 // pred_check_branch
          %204 = sbr.rel (%p202) target = $region28
        $region27: #{text_embedding_forward.2} parent=11 // pred_region
          %s206 = ssub.s32 2048, 2048
          %207 = vsyncadd [#allocation8], %s206
          %s208 = sshll.u32 [#allocation7], 4
          %s209 = int_to_ptr.vmem [resolvable:$true] %s208
          %214 = dma.hbm_to_vmem [thread:$0]  %s4, 2048, %s209, [#allocation8], 64, 64, 4
        $region28: #{text_embedding_forward.2} parent=11 // pred_fallthru
          _
      $region12: #{text_embedding_forward.2} parent=5 // pred_fallthru
        _
      %p215 = scmp.lt.s32.totalorder %s14, 2
      // Predicated region
      $region29: #{text_embedding_forward.2} parent=5 // pred_check
        %p216 = pneg %p215
      $region30: #{text_embedding_forward.2} parent=5 // pred_check_branch
        %218 = sbr.rel (%p216) target = $region32
      $region31: #{text_embedding_forward.2} parent=5 // pred_region
        // Predicated region
        $region33: #{text_embedding_forward.2} parent=31 // pred_check
          %p219 = pneg %p34
        $region34: #{text_embedding_forward.2} parent=31 // pred_check_branch
          %221 = sbr.rel (%p219) target = $region36
        $region35: #{text_embedding_forward.2} parent=31 // pred_region
          %p222 = scmp.lt.s32.totalorder %s14, 1
          %s223 = scalar_select %p222, %s14, 1
          %s224 = smul.addr %s223, 8
          %s225 = smul.addr %s224, 4
          %s226 = scalar_lea.vmem %s0, %s225
        $region36: #{text_embedding_forward.2} parent=31 // pred_fallthru
          _
      $region32: #{text_embedding_forward.2} parent=5 // pred_fallthru
        _
      %p227 = scmp.le.s32.totalorder 1, %s14
      %p228 = scmp.lt.s32.totalorder %s14, 3
      %p229 = pnand %p227, %p228
      %p230 = pneg %p229
      // Predicated region
      $region37: #{text_embedding_forward.2} parent=5 // pred_check
        _
      $region38: #{text_embedding_forward.2} parent=5 // pred_check_branch
        %232 = sbr.rel (%p229) target = $region40
      $region39: #{text_embedding_forward.2} parent=5 // pred_region
        %s233 = ssub.s32 %s14, 1
        // Predicated region
        $region41: #{text_embedding_forward.2} parent=39 // pred_check
          %p234 = pneg %p61
        $region42: #{text_embedding_forward.2} parent=39 // pred_check_branch
          %236 = sbr.rel (%p234) target = $region44
        $region43: #{text_embedding_forward.2} parent=39 // pred_region
          %237 = dma.done [#allocation3], 256
        $region44: #{text_embedding_forward.2} parent=39 // pred_fallthru
          _
        // Predicated region
        $region45: #{text_embedding_forward.2} parent=39 // pred_check
          %p238 = pneg %p82
        $region46: #{text_embedding_forward.2} parent=39 // pred_check_branch
          %240 = sbr.rel (%p238) target = $region48
        $region47: #{text_embedding_forward.2} parent=39 // pred_region
          %241 = dma.done [#allocation5], 256
        $region48: #{text_embedding_forward.2} parent=39 // pred_fallthru
          _
        // Predicated region
        $region49: #{text_embedding_forward.2} parent=39 // pred_check
          %p242 = pneg %p103
        $region50: #{text_embedding_forward.2} parent=39 // pred_check_branch
          %244 = sbr.rel (%p242) target = $region52
        $region51: #{text_embedding_forward.2} parent=39 // pred_region
          %245 = dma.done [#allocation5], 2048
        $region52: #{text_embedding_forward.2} parent=39 // pred_fallthru
          _
        // Predicated region
        $region53: #{text_embedding_forward.2} parent=39 // pred_check
          %p246 = pneg %p124
        $region54: #{text_embedding_forward.2} parent=39 // pred_check_branch
          %248 = sbr.rel (%p246) target = $region56
        $region55: #{text_embedding_forward.2} parent=39 // pred_region
          %249 = dma.done [#allocation8], 2048
        $region56: #{text_embedding_forward.2} parent=39 // pred_fallthru
          _
        %p250 = scmp.lt.s32.totalorder %s19, 1
        %s251 = scalar_select %p250, %s19, 1
        %s252 = smul.addr %s251, 8
        %s253 = smul.addr %s252, 4
        %s254 = scalar_lea.vmem %s0, %s253
        %p255 = pneg %p40
        %p256 = pneg %p37
        %p257 = pneg %p61
        %p258 = pneg %p58
        %p259 = pneg %p82
        %p260 = pneg %p79
        %p261 = pneg %p103
        %p262 = pneg %p100
        %p263 = pneg %p124
        %p264 = pneg %p121
        %p265 = pneg %p150
        %p266 = pneg %p147
        %p267 = scmp.lt.s32.totalorder %s19, 1
        %s268 = scalar_select %p267, %s19, 1
        %s269 = smul.addr %s268, 8
        %s270 = smul.addr %s269, 4
        %s271 = scalar_lea.vmem %s5, %s270
        %p272 = scmp.lt.s32.totalorder %s19, 1
        %s273 = scalar_select %p272, %s19, 1
        %s274 = smul.addr %s273, 8
        %s275 = smul.addr %s274, 4
        %s276 = scalar_lea.vmem %s0, %s275
        %p277 = scmp.lt.s32.totalorder %s19, 1
        %s278 = scalar_select %p277, %s19, 1
        %s279 = smul.addr %s278, 8
        %s280 = smul.addr %s279, 4
        %s281 = scalar_lea.vmem %s5, %s280
        %v283 = vld [vmem:[%s276 + $0x4] sm:$0xf]
        %v284 = vld [vmem:[%s276 + $0x8] sm:$0xf]
        %v285 = vld [vmem:[%s276 + $0xc] sm:$0xf]
        %v286 = vld [vmem:[%s276 + $0x10] sm:$0xf]
        %v287 = vld [vmem:[%s276 + $0x14] sm:$0xf]
        %v288 = vld [vmem:[%s276 + $0x18] sm:$0xf]
        %v289 = vunpack.c.l.bf16 %v283
        %v290 = vunpack.c.l.bf16 %v284
        %v291 = vunpack.c.l.bf16 %v285
        %v292 = vunpack.c.l.bf16 %v286
        %v293 = vunpack.c.l.bf16 %v287
        %v294 = vunpack.c.l.bf16 %v288
        %v295 = vrot.slane %v289, 5
        %v296 = vrot.slane %v290, 5
        %v297 = vrot.slane %v291, 5
        %v298 = vrot.slane %v292, 5
        %v299 = vrot.slane %v293, 5
        %v300 = vlaneseq
        %v301 = vshrl.u32 %v300, 7
        %vm302 = vcmp.lt.s32.totalorder %v301, 3
        %v303 = vsel %vm302, %v298, %v299
        %v304 = vsel %vm302, %v297, %v298
        %v305 = vsel %vm302, %v296, %v297
        %v306 = vsel %vm302, %v295, %v296
        %v307 = vld [vmem:[#allocation2] sm:$0x1]
        %v308 = vlaneseq
        %v309 = vshrl.u32 %v308, 7
        %v310 = vsub.s32 0, %v309
        %v311 = vrot.slane %v307, %v310
        %v312 = vmul.f32 %v306, %v311
        %v313 = vmul.f32 %v305, %v311
        %v314 = vmul.f32 %v304, %v311
        %v315 = vmul.f32 %v303, %v311
        %v316 = vadd.f32 %v312, 0.0
        %v317 = vadd.f32 %v313, 0.0
        %v318 = vadd.f32 %v314, 0.0
        %v319 = vadd.f32 %v315, 0.0
        %v320 = vrot.slane %v289, 6
        %v321 = vrot.slane %v290, 6
        %v322 = vrot.slane %v291, 6
        %v323 = vrot.slane %v292, 6
        %v324 = vrot.slane %v293, 6
        %vm325 = vcmp.lt.s32.totalorder %v301, 2
        %v326 = vsel %vm325, %v323, %v324
        %v327 = vsel %vm325, %v322, %v323
        %v328 = vsel %vm325, %v321, %v322
        %v329 = vsel %vm325, %v320, %v321
        %v330 = vld [vmem:[#allocation2 + $0x1] sm:$0x1]
        %v331 = vlaneseq
        %v332 = vshrl.u32 %v331, 7
        %v333 = vsub.s32 0, %v332
        %v334 = vrot.slane %v330, %v333
        %v335 = vmul.f32 %v329, %v334
        %v336 = vmul.f32 %v328, %v334
        %v337 = vmul.f32 %v327, %v334
        %v338 = vmul.f32 %v326, %v334
        %v339 = vadd.f32 %v316, %v335
        %v340 = vadd.f32 %v317, %v336
        %v341 = vadd.f32 %v318, %v337
        %v342 = vadd.f32 %v319, %v338
        %v343 = vrot.slane %v289, 7
        %v344 = vrot.slane %v290, 7
        %v345 = vrot.slane %v291, 7
        %v346 = vrot.slane %v292, 7
        %v347 = vrot.slane %v293, 7
        %vm348 = vcmp.lt.s32.totalorder %v301, 1
        %v349 = vsel %vm348, %v346, %v347
        %v350 = vsel %vm348, %v345, %v346
        %v351 = vsel %vm348, %v344, %v345
        %v352 = vsel %vm348, %v343, %v344
        %v353 = vld [vmem:[#allocation2 + $0x2] sm:$0x1]
        %v354 = vlaneseq
        %v355 = vshrl.u32 %v354, 7
        %v356 = vsub.s32 0, %v355
        %v357 = vrot.slane %v353, %v356
        %v358 = vmul.f32 %v352, %v357
        %v359 = vmul.f32 %v351, %v357
        %v360 = vmul.f32 %v350, %v357
        %v361 = vmul.f32 %v349, %v357
        %v362 = vadd.f32 %v339, %v358
        %v363 = vadd.f32 %v340, %v359
        %v364 = vadd.f32 %v341, %v360
        %v365 = vadd.f32 %v342, %v361
        %v366 = vld [vmem:[#allocation2 + $0x3] sm:$0x1]
        %v367 = vlaneseq
        %v368 = vshrl.u32 %v367, 7
        %v369 = vsub.s32 0, %v368
        %v370 = vrot.slane %v366, %v369
        %v371 = vmul.f32 %v290, %v370
        %v372 = vmul.f32 %v291, %v370
        %v373 = vmul.f32 %v292, %v370
        %v374 = vmul.f32 %v293, %v370
        %v375 = vadd.f32 %v362, %v371
        %v376 = vadd.f32 %v363, %v372
        %v377 = vadd.f32 %v364, %v373
        %v378 = vadd.f32 %v365, %v374
        %v379 = vrot.slane %v290, 1
        %v380 = vrot.slane %v291, 1
        %v381 = vrot.slane %v292, 1
        %v382 = vrot.slane %v293, 1
        %v383 = vrot.slane %v294, 1
        %vm384 = vcmp.lt.s32.totalorder %v301, 7
        %v385 = vsel %vm384, %v382, %v383
        %v386 = vsel %vm384, %v381, %v382
        %v387 = vsel %vm384, %v380, %v381
        %v388 = vsel %vm384, %v379, %v380
        %v389 = vld [vmem:[#allocation2 + $0x4] sm:$0x1]
        %v390 = vlaneseq
        %v391 = vshrl.u32 %v390, 7
        %v392 = vsub.s32 0, %v391
        %v393 = vrot.slane %v389, %v392
        %v394 = vmul.f32 %v388, %v393
        %v395 = vmul.f32 %v387, %v393
        %v396 = vmul.f32 %v386, %v393
        %v397 = vmul.f32 %v385, %v393
        %v398 = vadd.f32 %v375, %v394
        %v399 = vadd.f32 %v376, %v395
        %v400 = vadd.f32 %v377, %v396
        %v401 = vadd.f32 %v378, %v397
        %v402 = vrot.slane %v290, 2
        %v403 = vrot.slane %v291, 2
        %v404 = vrot.slane %v292, 2
        %v405 = vrot.slane %v293, 2
        %v406 = vrot.slane %v294, 2
        %vm407 = vcmp.lt.s32.totalorder %v301, 6
        %v408 = vsel %vm407, %v405, %v406
        %v409 = vsel %vm407, %v404, %v405
        %v410 = vsel %vm407, %v403, %v404
        %v411 = vsel %vm407, %v402, %v403
        %v412 = vld [vmem:[#allocation2 + $0x5] sm:$0x1]
        %v413 = vlaneseq
        %v414 = vshrl.u32 %v413, 7
        %v415 = vsub.s32 0, %v414
        %v416 = vrot.slane %v412, %v415
        %v417 = vmul.f32 %v411, %v416
        %v418 = vmul.f32 %v410, %v416
        %v419 = vmul.f32 %v409, %v416
        %v420 = vmul.f32 %v408, %v416
        %v421 = vadd.f32 %v398, %v417
        %v422 = vadd.f32 %v399, %v418
        %v423 = vadd.f32 %v400, %v419
        %v424 = vadd.f32 %v401, %v420
        %v425 = vrot.slane %v290, 3
        %v426 = vrot.slane %v291, 3
        %v427 = vrot.slane %v292, 3
        %v428 = vrot.slane %v293, 3
        %v429 = vrot.slane %v294, 3
        %vm430 = vcmp.lt.s32.totalorder %v301, 5
        %v431 = vsel %vm430, %v428, %v429
        %v432 = vsel %vm430, %v427, %v428
        %v433 = vsel %vm430, %v426, %v427
        %v434 = vsel %vm430, %v425, %v426
        %v435 = vld [vmem:[#allocation2 + $0x6] sm:$0x1]
        %v436 = vlaneseq
        %v437 = vshrl.u32 %v436, 7
        %v438 = vsub.s32 0, %v437
        %v439 = vrot.slane %v435, %v438
        %v440 = vmul.f32 %v434, %v439
        %v441 = vmul.f32 %v433, %v439
        %v442 = vmul.f32 %v432, %v439
        %v443 = vmul.f32 %v431, %v439
        %v444 = vadd.f32 %v421, %v440
        %v445 = vadd.f32 %v422, %v441
        %v446 = vadd.f32 %v423, %v442
        %v447 = vadd.f32 %v424, %v443
        %v448 = vld [vmem:[#allocation2 + $0x7] sm:$0x1]
        %v449 = vlaneseq
        %v450 = vshrl.u32 %v449, 7
        %v451 = vsub.s32 0, %v450
        %v452 = vrot.slane %v448, %v451
        %v453 = vadd.f32 %v444, %v452
        %v454 = vadd.f32 %v445, %v452
        %v455 = vadd.f32 %v446, %v452
        %v456 = vadd.f32 %v447, %v452
        %457 = vadd.xlane.f32.xlu0 %v453
        %v458 = vpop.xlane.xlu0 %457
        %459 = vadd.xlane.f32.xlu0 %v454
        %v460 = vpop.xlane.xlu0 %459
        %461 = vadd.xlane.f32.xlu0 %v455
        %v462 = vpop.xlane.xlu0 %461
        %463 = vadd.xlane.f32.xlu0 %v456
        %v464 = vpop.xlane.xlu0 %463
        %v465 = vrcp.pop 128.0
        %v466 = vmul.f32 %v458, %v465
        %v467 = vmul.f32 %v460, %v465
        %v468 = vmul.f32 %v462, %v465
        %v469 = vmul.f32 %v464, %v465
        %v470 = vsub.f32 %v453, %v466
        %v471 = vsub.f32 %v454, %v467
        %v472 = vsub.f32 %v455, %v468
        %v473 = vsub.f32 %v456, %v469
        %v474 = vmul.f32 %v470, %v470
        %v475 = vmul.f32 %v471, %v471
        %v476 = vmul.f32 %v472, %v472
        %v477 = vmul.f32 %v473, %v473
        %478 = vadd.xlane.f32.xlu0 %v474
        %v479 = vpop.xlane.xlu0 %478
        %480 = vadd.xlane.f32.xlu0 %v475
        %v481 = vpop.xlane.xlu0 %480
        %482 = vadd.xlane.f32.xlu0 %v476
        %v483 = vpop.xlane.xlu0 %482
        %484 = vadd.xlane.f32.xlu0 %v477
        %v485 = vpop.xlane.xlu0 %484
        %v486 = vmul.f32 %v479, %v465
        %v487 = vmul.f32 %v481, %v465
        %v488 = vmul.f32 %v483, %v465
        %v489 = vmul.f32 %v485, %v465
        %v490 = vadd.f32 %v486, 1e-06
        %v491 = vadd.f32 %v487, 1e-06
        %v492 = vadd.f32 %v488, 1e-06
        %v493 = vadd.f32 %v489, 1e-06
        %v494 = vrsqrt.pop %v490
        %v495 = vrsqrt.pop %v491
        %v496 = vrsqrt.pop %v492
        %v497 = vrsqrt.pop %v493
        %v498 = vmul.f32 %v470, %v494
        %v499 = vmul.f32 %v471, %v495
        %v500 = vmul.f32 %v472, %v496
        %v501 = vmul.f32 %v473, %v497
        %v502 = vld [vmem:[#allocation2 + $0x8] sm:$0x1]
        %v503 = vlaneseq
        %v504 = vshrl.u32 %v503, 7
        %v505 = vsub.s32 0, %v504
        %v506 = vrot.slane %v502, %v505
        %v507 = vmul.f32 %v498, %v506
        %v508 = vmul.f32 %v499, %v506
        %v509 = vmul.f32 %v500, %v506
        %v510 = vmul.f32 %v501, %v506
        %v511 = vld [vmem:[#allocation2 + $0x9] sm:$0x1]
        %v512 = vlaneseq
        %v513 = vshrl.u32 %v512, 7
        %v514 = vsub.s32 0, %v513
        %v515 = vrot.slane %v511, %v514
        %v516 = vadd.f32 %v507, %v515
        %v517 = vadd.f32 %v508, %v515
        %v518 = vadd.f32 %v509, %v515
        %v519 = vadd.f32 %v510, %v515
        %v520 = vpack.c.bf16 %v517, %v516
        %v521 = vpack.c.bf16 %v519, %v518
        %v522 = vld [vmem:[#allocation6] sm:$0xff]
        %v523 = vld [vmem:[#allocation6 + $0x8] sm:$0xff]
        %v524 = vld [vmem:[#allocation6 + $0x10] sm:$0xff]
        %v525 = vld [vmem:[#allocation6 + $0x18] sm:$0xff]
        %v526 = vld [vmem:[#allocation6 + $0x20] sm:$0xff]
        %v527 = vld [vmem:[#allocation6 + $0x28] sm:$0xff]
        %v528 = vld [vmem:[#allocation6 + $0x30] sm:$0xff]
        %v529 = vld [vmem:[#allocation6 + $0x38] sm:$0xff]
        %v530 = vld [vmem:[#allocation6 + $0x40] sm:$0xff]
        %v531 = vld [vmem:[#allocation6 + $0x48] sm:$0xff]
        %v532 = vld [vmem:[#allocation6 + $0x50] sm:$0xff]
        %v533 = vld [vmem:[#allocation6 + $0x58] sm:$0xff]
        %v534 = vld [vmem:[#allocation6 + $0x60] sm:$0xff]
        %v535 = vld [vmem:[#allocation6 + $0x68] sm:$0xff]
        %v536 = vld [vmem:[#allocation6 + $0x70] sm:$0xff]
        %v537 = vld [vmem:[#allocation6 + $0x78] sm:$0xff]
        %v538 = vld [vmem:[#allocation4] ss:$8 sm:$0x3]
        %v540 = vlaneseq
        %v541 = vshrl.u32 %v540, 7
        %v542 = vsub.s32 0, %v541
        %v543 = vrot.slane %v538, %v542
        %v544 = vlaneseq
        %v545 = vshrl.u32 %v544, 7
        %v546 = vsub.s32 1, %v545
        %v547 = vrot.slane %v538, %v546
        %v566 = vunpack.c.l.b16 %v522
        %v567 = vunpack.c.h.b16 %v522
        %v568 = vunpack.c.l.b16 %v523
        %v569 = vunpack.c.h.b16 %v523
        %v570 = vunpack.c.l.b16 %v524
        %v571 = vunpack.c.h.b16 %v524
        %v572 = vunpack.c.l.b16 %v525
        %v573 = vunpack.c.h.b16 %v525
        %v574 = vunpack.c.l.b16 %v526
        %v575 = vunpack.c.h.b16 %v526
        %v576 = vunpack.c.l.b16 %v527
        %v577 = vunpack.c.h.b16 %v527
        %v578 = vunpack.c.l.b16 %v528
        %v579 = vunpack.c.h.b16 %v528
        %v580 = vunpack.c.l.b16 %v529
        %v581 = vunpack.c.h.b16 %v529
        %v582 = vunpack.c.l.b16 %v530
        %v583 = vunpack.c.h.b16 %v530
        %v584 = vunpack.c.l.b16 %v531
        %v585 = vunpack.c.h.b16 %v531
        %v586 = vunpack.c.l.b16 %v532
        %v587 = vunpack.c.h.b16 %v532
        %v588 = vunpack.c.l.b16 %v533
        %v589 = vunpack.c.h.b16 %v533
        %v590 = vunpack.c.l.b16 %v534
        %v591 = vunpack.c.h.b16 %v534
        %v592 = vunpack.c.l.b16 %v535
        %v593 = vunpack.c.h.b16 %v535
        %v594 = vunpack.c.l.b16 %v536
        %v595 = vunpack.c.h.b16 %v536
        %v596 = vunpack.c.l.b16 %v537
        %v597 = vunpack.c.h.b16 %v537
        %v598 = vpack.c.b16 %v568, %v566
        %v599 = vpack.c.b16 %v569, %v567
        %v600 = vpack.c.b16 %v572, %v570
        %v601 = vpack.c.b16 %v573, %v571
        %v602 = vpack.c.b16 %v576, %v574
        %v603 = vpack.c.b16 %v577, %v575
        %v604 = vpack.c.b16 %v580, %v578
        %v605 = vpack.c.b16 %v581, %v579
        %v606 = vpack.c.b16 %v584, %v582
        %v607 = vpack.c.b16 %v585, %v583
        %v608 = vpack.c.b16 %v588, %v586
        %v609 = vpack.c.b16 %v589, %v587
        %v610 = vpack.c.b16 %v592, %v590
        %v611 = vpack.c.b16 %v593, %v591
        %v612 = vpack.c.b16 %v596, %v594
        %v613 = vpack.c.b16 %v597, %v595
        %630 = vmatprep.subr.bf16.mxu0 %v599
        %631 = vmatpush1.bf16.msra.mxu0 %v598
        %632 = vmatprep.subr.bf16.mxu0 %v601
        %633 = vmatpush1.bf16.msra.mxu0 %v600
        %634 = vmatprep.subr.bf16.mxu0 %v603
        %635 = vmatpush1.bf16.msra.mxu0 %v602
        %636 = vmatprep.subr.bf16.mxu0 %v605
        %637 = vmatpush1.bf16.msra.mxu0 %v604
        %638 = vmatprep.subr.bf16.mxu0 %v607
        %639 = vmatpush1.bf16.msra.mxu0 %v606
        %640 = vmatprep.subr.bf16.mxu0 %v609
        %641 = vmatpush1.bf16.msra.mxu0 %v608
        %642 = vmatprep.subr.bf16.mxu0 %v611
        %643 = vmatpush1.bf16.msra.mxu0 %v610
        %644 = vmatprep.subr.bf16.mxu0 %v613
        %645 = vmatpush1.bf16.msra.mxu0 %v612
        %646 = vmatprep.subr.bf16.mxu0 0
        %647 = vmatpush1.bf16.msra.mxu0 0
        %648 = vmatprep.subr.bf16.mxu0 0
        %649 = vmatpush1.bf16.msra.mxu0 0
        %650 = vmatprep.subr.bf16.mxu0 0
        %651 = vmatpush1.bf16.msra.mxu0 0
        %652 = vmatprep.subr.bf16.mxu0 0
        %653 = vmatpush1.bf16.msra.mxu0 0
        %654 = vmatprep.subr.bf16.mxu0 0
        %655 = vmatpush1.bf16.msra.mxu0 0
        %656 = vmatprep.subr.bf16.mxu0 0
        %657 = vmatpush1.bf16.msra.mxu0 0
        %658 = vmatprep.subr.bf16.mxu0 0
        %659 = vmatpush1.bf16.msra.mxu0 0
        %660 = vmatprep.subr.bf16.mxu0 0
        %661 = vmatpush1.bf16.msra.mxu0 0
        %662 = vmatprep.mubr.bf16.mxu0 0
        %663 = vmatmul.mubr.bf16.gmra.mrb[0].mxu0 %v520
        %v664 = vpop.f32.mrb[0].mxu0
        %v665 = vadd.f32 %v543, %v664
        %v666 = vpop.f32.mrb[0].mxu0
        %v667 = vadd.f32 %v547, %v666
        %v668 = vpop.f32.mrb[0].mxu0
        %v669 = vadd.f32 %v543, %v668
        %v670 = vpop.f32.mrb[0].mxu0
        %v671 = vadd.f32 %v547, %v670
        %672 = vmatprep.mubr.bf16.mxu0 0
        %673 = vmatmul.mubr.bf16.gmra.mrb[0].mxu0 %v521
        %v674 = vpop.f32.mrb[0].mxu0
        %v675 = vadd.f32 %v543, %v674
        %v676 = vpop.f32.mrb[0].mxu0
        %v677 = vadd.f32 %v547, %v676
        %v678 = vpop.f32.mrb[0].mxu0
        %v679 = vadd.f32 %v543, %v678
        %v680 = vpop.f32.mrb[0].mxu0
        %v681 = vadd.f32 %v547, %v680
        %682 = vdwg.mxu0
        %v683 = vmul.f32 %v665, 0.5
        %v684 = vmul.f32 %v667, 0.5
        %v685 = vmul.f32 %v669, 0.5
        %v686 = vmul.f32 %v671, 0.5
        %v687 = vmul.f32 %v675, 0.5
        %v688 = vmul.f32 %v677, 0.5
        %v689 = vmul.f32 %v679, 0.5
        %v690 = vmul.f32 %v681, 0.5
        %v691 = vmul.f32 %v665, 0.70710677
        %v692 = vmul.f32 %v667, 0.70710677
        %v693 = vmul.f32 %v669, 0.70710677
        %v694 = vmul.f32 %v671, 0.70710677
        %v695 = vmul.f32 %v675, 0.70710677
        %v696 = vmul.f32 %v677, 0.70710677
        %v697 = vmul.f32 %v679, 0.70710677
        %v698 = vmul.f32 %v681, 0.70710677
        %v699 = verf.f32.pop %v691
        %v700 = verf.f32.pop %v692
        %v701 = verf.f32.pop %v693
        %v702 = verf.f32.pop %v694
        %v703 = verf.f32.pop %v695
        %v704 = verf.f32.pop %v696
        %v705 = verf.f32.pop %v697
        %v706 = verf.f32.pop %v698
        %v707 = vadd.f32 %v699, 1.0
        %v708 = vadd.f32 %v700, 1.0
        %v709 = vadd.f32 %v701, 1.0
        %v710 = vadd.f32 %v702, 1.0
        %v711 = vadd.f32 %v703, 1.0
        %v712 = vadd.f32 %v704, 1.0
        %v713 = vadd.f32 %v705, 1.0
        %v714 = vadd.f32 %v706, 1.0
        %v715 = vmul.f32 %v683, %v707
        %v716 = vmul.f32 %v684, %v708
        %v717 = vmul.f32 %v685, %v709
        %v718 = vmul.f32 %v686, %v710
        %v719 = vmul.f32 %v687, %v711
        %v720 = vmul.f32 %v688, %v712
        %v721 = vmul.f32 %v689, %v713
        %v722 = vmul.f32 %v690, %v714
        %v723 = vadd.s32 %v301, 8
        %v724 = vadd.s32 %v301, 16
        %v725 = vadd.s32 %v301, 24
        %vm726 = vcmp.lt.s32.totalorder %v301, 24
        %vm727 = vcmp.lt.s32.totalorder %v723, 24
        %vm728 = vcmp.lt.s32.totalorder %v724, 24
        %vm729 = vcmp.lt.s32.totalorder %v725, 24
        %v730 = vsel %vm726, 1, 0
        %v731 = vsel %vm727, 1, 0
        %v732 = vsel %vm728, 1, 0
        %v733 = vsel %vm729, 1, 0
        %vm734 = vcmp.eq.s32.totalorder %v730, 1
        %vm735 = vcmp.eq.s32.totalorder %v731, 1
        %vm736 = vcmp.eq.s32.totalorder %v732, 1
        %vm737 = vcmp.eq.s32.totalorder %v733, 1
        %v738 = vsel %vm734, %v715, 0.0
        %v739 = vsel %vm734, %v716, 0.0
        %v740 = vsel %vm735, %v717, 0.0
        %v741 = vsel %vm735, %v718, 0.0
        %v742 = vsel %vm736, %v719, 0.0
        %v743 = vsel %vm736, %v720, 0.0
        %v744 = vsel %vm737, %v721, 0.0
        %v745 = vsel %vm737, %v722, 0.0
        %v746 = vmul.f32 %v738, %v738
        %v747 = vmul.f32 %v739, %v739
        %v748 = vmul.f32 %v740, %v740
        %v749 = vmul.f32 %v741, %v741
        %v750 = vmul.f32 %v742, %v742
        %v751 = vmul.f32 %v743, %v743
        %v752 = vmul.f32 %v744, %v744
        %v753 = vmul.f32 %v745, %v745
        %v754 = vadd.f32 %v746, %v748
        %v755 = vadd.f32 %v754, %v750
        %v756 = vadd.f32 %v755, %v752
        %v757 = vrot.slane %v756, 4
        %v758 = vadd.f32 %v756, %v757
        %v759 = vrot.slane %v758, 2
        %v760 = vadd.f32 %v758, %v759
        %v761 = vrot.slane %v760, 1
        %v762 = vadd.f32 %v760, %v761
        %v763 = vadd.f32 %v747, %v749
        %v764 = vadd.f32 %v763, %v751
        %v765 = vadd.f32 %v764, %v753
        %v766 = vrot.slane %v765, 4
        %v767 = vadd.f32 %v765, %v766
        %v768 = vrot.slane %v767, 2
        %v769 = vadd.f32 %v767, %v768
        %v770 = vrot.slane %v769, 1
        %v771 = vadd.f32 %v769, %v770
        %v772 = vrsqrt.pop %v762
        %v773 = vmul.f32 %v762, %v772
        %vm774 = vcmp.eq.f32.partialorder %v762, inf
        %v775 = vsel %vm774, %v762, %v773
        %vm776 = vcmp.eq.f32.partialorder %v762, 0.0
        %v777 = vand.u32 %v762, 2147483648
        %v778 = vsel %vm776, %v777, %v775
        %v779 = vrsqrt.pop %v771
        %v780 = vmul.f32 %v771, %v779
        %vm781 = vcmp.eq.f32.partialorder %v771, inf
        %v782 = vsel %vm781, %v771, %v780
        %vm783 = vcmp.eq.f32.partialorder %v771, 0.0
        %v784 = vand.u32 %v771, 2147483648
        %v785 = vsel %vm783, %v784, %v782
        %v786 = vadd.f32 %v778, %v785
        %787 = vadd.xlane.f32.xlu0 %v786
        %v788 = vpop.xlane.xlu0 %787
        %v789 = vrcp.pop 256.0
        %v790 = vmul.f32 %v788, %v789
        %v791 = vadd.f32 %v790, 1e-06
        %v792 = vrcp.pop %v791
        %v793 = vmul.f32 %v778, %v792
        %v794 = vmul.f32 %v785, %v792
        %s795 = scalar_lea.vmem [#allocation4], 1
        %v796 = vld [vmem:[%s795] ss:$8 sm:$0x3]
        %v799 = vcombine.low %v793, %v794
        %v801 = vunpack.c.l.s4 1966171168
        %v802 = vunpack.c.0.s8 %v801
        %v803 = vlaneseq
        %v804 = vshrl.u32 %v803, 7
        %v805 = vsub.s32 %v802, %v804
        %v806 = vrot.slane %v799, %v805
        %v808 = vunpack.c.l.s4 1966171168
        %v809 = vunpack.c.0.s8 %v808
        %v810 = vlaneseq
        %v811 = vshrl.u32 %v810, 7
        %v812 = vsub.s32 %v809, %v811
        %v813 = vrot.slane %v806, %v812
        %v815 = vmul.f32 %v796, %v813
        %v816 = vadd.f32 %v815, 1.0
        %v818 = vlaneseq
        %v819 = vshrl.u32 %v818, 7
        %v820 = vsub.s32 0, %v819
        %v821 = vrot.slane %v816, %v820
        %v822 = vlaneseq
        %v823 = vshrl.u32 %v822, 7
        %v824 = vsub.s32 1, %v823
        %v825 = vrot.slane %v816, %v824
        %v828 = vmul.f32 %v715, %v821
        %v829 = vmul.f32 %v716, %v825
        %v830 = vmul.f32 %v717, %v821
        %v831 = vmul.f32 %v718, %v825
        %v832 = vmul.f32 %v719, %v821
        %v833 = vmul.f32 %v720, %v825
        %v834 = vmul.f32 %v721, %v821
        %v835 = vmul.f32 %v722, %v825
        %s836 = scalar_lea.vmem [#allocation4], 2
        %v837 = vld [vmem:[%s836] ss:$8 sm:$0x3]
        %v839 = vlaneseq
        %v840 = vshrl.u32 %v839, 7
        %v841 = vsub.s32 0, %v840
        %v842 = vrot.slane %v837, %v841
        %v843 = vlaneseq
        %v844 = vshrl.u32 %v843, 7
        %v845 = vsub.s32 1, %v844
        %v846 = vrot.slane %v837, %v845
        %v849 = vadd.f32 %v828, %v842
        %v850 = vadd.f32 %v829, %v846
        %v851 = vadd.f32 %v830, %v842
        %v852 = vadd.f32 %v831, %v846
        %v853 = vadd.f32 %v832, %v842
        %v854 = vadd.f32 %v833, %v846
        %v855 = vadd.f32 %v834, %v842
        %v856 = vadd.f32 %v835, %v846
        %v857 = vpack.c.bf16 %v851, %v849
        %v858 = vpack.c.bf16 %v852, %v850
        %v859 = vpack.c.bf16 %v855, %v853
        %v860 = vpack.c.bf16 %v856, %v854
        %v861 = vld [vmem:[#allocation7] sm:$0xf]
        %v862 = vld [vmem:[#allocation7 + $0x4] sm:$0xf]
        %v863 = vld [vmem:[#allocation7 + $0x8] sm:$0xf]
        %v864 = vld [vmem:[#allocation7 + $0xc] sm:$0xf]
        %v865 = vld [vmem:[#allocation7 + $0x10] sm:$0xf]
        %v866 = vld [vmem:[#allocation7 + $0x14] sm:$0xf]
        %v867 = vld [vmem:[#allocation7 + $0x18] sm:$0xf]
        %v868 = vld [vmem:[#allocation7 + $0x1c] sm:$0xf]
        %v869 = vld [vmem:[#allocation7 + $0x20] sm:$0xf]
        %v870 = vld [vmem:[#allocation7 + $0x24] sm:$0xf]
        %v871 = vld [vmem:[#allocation7 + $0x28] sm:$0xf]
        %v872 = vld [vmem:[#allocation7 + $0x2c] sm:$0xf]
        %v873 = vld [vmem:[#allocation7 + $0x30] sm:$0xf]
        %v874 = vld [vmem:[#allocation7 + $0x34] sm:$0xf]
        %v875 = vld [vmem:[#allocation7 + $0x38] sm:$0xf]
        %v876 = vld [vmem:[#allocation7 + $0x3c] sm:$0xf]
        %v877 = vld [vmem:[#allocation7 + $0x40] sm:$0xf]
        %v878 = vld [vmem:[#allocation7 + $0x44] sm:$0xf]
        %v879 = vld [vmem:[#allocation7 + $0x48] sm:$0xf]
        %v880 = vld [vmem:[#allocation7 + $0x4c] sm:$0xf]
        %v881 = vld [vmem:[#allocation7 + $0x50] sm:$0xf]
        %v882 = vld [vmem:[#allocation7 + $0x54] sm:$0xf]
        %v883 = vld [vmem:[#allocation7 + $0x58] sm:$0xf]
        %v884 = vld [vmem:[#allocation7 + $0x5c] sm:$0xf]
        %v885 = vld [vmem:[#allocation7 + $0x60] sm:$0xf]
        %v886 = vld [vmem:[#allocation7 + $0x64] sm:$0xf]
        %v887 = vld [vmem:[#allocation7 + $0x68] sm:$0xf]
        %v888 = vld [vmem:[#allocation7 + $0x6c] sm:$0xf]
        %v889 = vld [vmem:[#allocation7 + $0x70] sm:$0xf]
        %v890 = vld [vmem:[#allocation7 + $0x74] sm:$0xf]
        %v891 = vld [vmem:[#allocation7 + $0x78] sm:$0xf]
        %v892 = vld [vmem:[#allocation7 + $0x7c] sm:$0xf]
        %v893 = vld [vmem:[#allocation2 + $0xa] sm:$0x1]
        %v894 = vlaneseq
        %v895 = vshrl.u32 %v894, 7
        %v896 = vsub.s32 0, %v895
        %v897 = vrot.slane %v893, %v896
        %v930 = vunpack.c.l.b16 %v861
        %v931 = vunpack.c.l.b16 %v862
        %v932 = vunpack.c.l.b16 %v863
        %v933 = vunpack.c.l.b16 %v864
        %v934 = vunpack.c.l.b16 %v865
        %v935 = vunpack.c.l.b16 %v866
        %v936 = vunpack.c.l.b16 %v867
        %v937 = vunpack.c.l.b16 %v868
        %v938 = vunpack.c.l.b16 %v869
        %v939 = vunpack.c.l.b16 %v870
        %v940 = vunpack.c.l.b16 %v871
        %v941 = vunpack.c.l.b16 %v872
        %v942 = vunpack.c.l.b16 %v873
        %v943 = vunpack.c.l.b16 %v874
        %v944 = vunpack.c.l.b16 %v875
        %v945 = vunpack.c.l.b16 %v876
        %v946 = vunpack.c.l.b16 %v877
        %v947 = vunpack.c.l.b16 %v878
        %v948 = vunpack.c.l.b16 %v879
        %v949 = vunpack.c.l.b16 %v880
        %v950 = vunpack.c.l.b16 %v881
        %v951 = vunpack.c.l.b16 %v882
        %v952 = vunpack.c.l.b16 %v883
        %v953 = vunpack.c.l.b16 %v884
        %v954 = vunpack.c.l.b16 %v885
        %v955 = vunpack.c.l.b16 %v886
        %v956 = vunpack.c.l.b16 %v887
        %v957 = vunpack.c.l.b16 %v888
        %v958 = vunpack.c.l.b16 %v889
        %v959 = vunpack.c.l.b16 %v890
        %v960 = vunpack.c.l.b16 %v891
        %v961 = vunpack.c.l.b16 %v892
        %v962 = vpack.c.b16 %v931, %v930
        %v963 = vpack.c.b16 %v933, %v932
        %v964 = vpack.c.b16 %v935, %v934
        %v965 = vpack.c.b16 %v937, %v936
        %v966 = vpack.c.b16 %v939, %v938
        %v967 = vpack.c.b16 %v941, %v940
        %v968 = vpack.c.b16 %v943, %v942
        %v969 = vpack.c.b16 %v945, %v944
        %v970 = vpack.c.b16 %v947, %v946
        %v971 = vpack.c.b16 %v949, %v948
        %v972 = vpack.c.b16 %v951, %v950
        %v973 = vpack.c.b16 %v953, %v952
        %v974 = vpack.c.b16 %v955, %v954
        %v975 = vpack.c.b16 %v957, %v956
        %v976 = vpack.c.b16 %v959, %v958
        %v977 = vpack.c.b16 %v961, %v960
        %994 = vmatprep.subr.bf16.mxu0 0
        %995 = vmatpush1.bf16.msra.mxu0 %v962
        %996 = vmatprep.subr.bf16.mxu0 0
        %997 = vmatpush1.bf16.msra.mxu0 %v963
        %998 = vmatprep.subr.bf16.mxu0 0
        %999 = vmatpush1.bf16.msra.mxu0 %v964
        %1000 = vmatprep.subr.bf16.mxu0 0
        %1001 = vmatpush1.bf16.msra.mxu0 %v965
        %1002 = vmatprep.subr.bf16.mxu0 0
        %1003 = vmatpush1.bf16.msra.mxu0 %v966
        %1004 = vmatprep.subr.bf16.mxu0 0
        %1005 = vmatpush1.bf16.msra.mxu0 %v967
        %1006 = vmatprep.subr.bf16.mxu0 0
        %1007 = vmatpush1.bf16.msra.mxu0 %v968
        %1008 = vmatprep.subr.bf16.mxu0 0
        %1009 = vmatpush1.bf16.msra.mxu0 %v969
        %1010 = vmatprep.subr.bf16.mxu0 0
        %1011 = vmatpush1.bf16.msra.mxu0 %v970
        %1012 = vmatprep.subr.bf16.mxu0 0
        %1013 = vmatpush1.bf16.msra.mxu0 %v971
        %1014 = vmatprep.subr.bf16.mxu0 0
        %1015 = vmatpush1.bf16.msra.mxu0 %v972
        %1016 = vmatprep.subr.bf16.mxu0 0
        %1017 = vmatpush1.bf16.msra.mxu0 %v973
        %1018 = vmatprep.subr.bf16.mxu0 0
        %1019 = vmatpush1.bf16.msra.mxu0 %v974
        %1020 = vmatprep.subr.bf16.mxu0 0
        %1021 = vmatpush1.bf16.msra.mxu0 %v975
        %1022 = vmatprep.subr.bf16.mxu0 0
        %1023 = vmatpush1.bf16.msra.mxu0 %v976
        %1024 = vmatprep.subr.bf16.mxu0 0
        %1025 = vmatpush1.bf16.msra.mxu0 %v977
        %1026 = vmatprep.mubr.bf16.mxu0 %v858
        %1027 = vmatmul.mubr.bf16.gmra.mrb[0].mxu0 %v857
        %v1028 = vpop.f32.mrb[0].mxu0
        %v1029 = vadd.f32 %v897, %v1028
        %v1030 = vpop.f32.mrb[0].mxu0
        %v1031 = vpop.f32.mrb[0].mxu0
        %v1032 = vadd.f32 %v897, %v1031
        %v1033 = vpop.f32.mrb[0].mxu0
        %1034 = vmatprep.mubr.bf16.mxu0 %v860
        %1035 = vmatmul.mubr.bf16.gmra.mrb[0].mxu0 %v859
        %v1036 = vpop.f32.mrb[0].mxu0
        %v1037 = vadd.f32 %v897, %v1036
        %v1038 = vpop.f32.mrb[0].mxu0
        %v1039 = vpop.f32.mrb[0].mxu0
        %v1040 = vadd.f32 %v897, %v1039
        %v1041 = vpop.f32.mrb[0].mxu0
        %1042 = vdwg.mxu0
        %v1043 = vld [vmem:[%s276 + $0x8] sm:$0xf]
        %v1044 = vld [vmem:[%s276 + $0xc] sm:$0xf]
        %v1045 = vld [vmem:[%s276 + $0x10] sm:$0xf]
        %v1046 = vld [vmem:[%s276 + $0x14] sm:$0xf]
        %v1047 = vunpack.c.l.bf16 %v1043
        %v1048 = vunpack.c.l.bf16 %v1044
        %v1049 = vunpack.c.l.bf16 %v1045
        %v1050 = vunpack.c.l.bf16 %v1046
        %v1051 = vadd.f32 %v1047, %v1029
        %v1052 = vadd.f32 %v1048, %v1032
        %v1053 = vadd.f32 %v1049, %v1037
        %v1054 = vadd.f32 %v1050, %v1040
        %v1055 = vsel %vm734, %v1051, 0.0
        %v1056 = vsel %vm735, %v1052, 0.0
        %v1057 = vsel %vm736, %v1053, 0.0
        %v1058 = vsel %vm737, %v1054, 0.0
        %v1059 = vpack.c.bf16 %v1056, %v1055
        %v1060 = vpack.c.bf16 %v1058, %v1057
        %v1063 = vunpack.c.l.b16 %v1059
        %v1064 = vunpack.c.h.b16 %v1059
        %v1065 = vunpack.c.l.b16 %v1060
        %v1066 = vunpack.c.h.b16 %v1060
        %v1067 = vpack.c.b16 %v1063, %v1063
        %v1068 = vpack.c.b16 %v1064, %v1064
        %v1069 = vpack.c.b16 %v1065, %v1065
        %v1070 = vpack.c.b16 %v1066, %v1066
        %1075 = vst [vmem:[%s281 + $0x8] sm:$0xf] %v1067
        %1076 = vst [vmem:[%s281 + $0xc] sm:$0xf] %v1068
        %1077 = vst [vmem:[%s281 + $0x10] sm:$0xf] %v1069
        %1078 = vst [vmem:[%s281 + $0x14] sm:$0xf] %v1070
        %1079 = vst [vmem:[%s281] sm:$0xf] 0
        %1080 = vst [vmem:[%s281 + $0x4] sm:$0xf] 0
        %1081 = vst [vmem:[%s281 + $0x18] sm:$0xf] 0
        %1082 = vst [vmem:[%s281 + $0x1c] sm:$0xf] 0
        %p1083 = scmp.lt.s32.totalorder %s19, 1
        %s1084 = scalar_select %p1083, %s19, 1
        %s1085 = smul.addr %s1084, 8
        %s1086 = smul.addr %s1085, 4
        %s1087 = scalar_lea.vmem %s5, %s1086
        // Predicated region
        $region57: #{text_embedding_forward.2} parent=39 // pred_check
          %p1088 = pneg %p147
        $region58: #{text_embedding_forward.2} parent=39 // pred_check_branch
          %1090 = sbr.rel (%p1088) target = $region60
        $region59: #{text_embedding_forward.2} parent=39 // pred_region
          _
        $region60: #{text_embedding_forward.2} parent=39 // pred_fallthru
          _
      $region40: #{text_embedding_forward.2} parent=5 // pred_fallthru
        _
      %p1091 = scmp.le.s32.totalorder 2, %s14
      // Predicated region
      $region61: #{text_embedding_forward.2} parent=5 // pred_check
        %p1092 = pneg %p1091
      $region62: #{text_embedding_forward.2} parent=5 // pred_check_branch
        %1094 = sbr.rel (%p1092) target = $region64
      $region63: #{text_embedding_forward.2} parent=5 // pred_region
        %s1095 = ssub.s32 %s14, 2
        // Predicated region
        $region65: #{text_embedding_forward.2} parent=63 // pred_check
          %p1096 = pneg %p153
        $region66: #{text_embedding_forward.2} parent=63 // pred_check_branch
          %1098 = sbr.rel (%p1096) target = $region68
        $region67: #{text_embedding_forward.2} parent=63 // pred_region
          %p1099 = scmp.lt.s32.totalorder %s20, 1
          %s1100 = scalar_select %p1099, %s20, 1
          %s1101 = smul.addr %s1100, 8
          %s1102 = smul.addr %s1101, 4
          %s1103 = scalar_lea.vmem %s5, %s1102
        $region68: #{text_embedding_forward.2} parent=63 // pred_fallthru
          _
      $region64: #{text_embedding_forward.2} parent=5 // pred_fallthru
        _
    $region6: #{text_embedding_forward.2} parent=1 // loop_footer
      %s18 = sadd.s32 1, %s14
    $region7: #{text_embedding_forward.2} parent=1 // loop_footer_branch
      %13 = sbr.rel target = $region3
    $region8: #{text_embedding_forward.2} parent=1 // loop_exit
      _
    %1104 = vsyncpa [#allocation3], 1
    %s1105 = scalar_lea.sflag [#allocation3], 1
    %1106 = vsyncpa %s1105, 1
    %1107 = vsyncpa [#allocation5], 1
    %1108 = vsyncpa [#allocation8], 1

</llo_original>
